<compile_context>
chip_gen: v7x
topology: tpu7x:2x2x1
jax: 0.10.0
libtpu: 0.0.40
codegen_flags: <defaults>
</compile_context>

<pallas_src>
import functools
import math

import jax
import jax.numpy as jnp
from jax.experimental import pallas as pl
from jax.experimental.pallas import tpu as pltpu


def critic_kernel(x_ref, w1_ref, b1_ref, w2bd_ref, b2_ref, g3_ref, b3_ref, out_ref,
                  *, seq_len, needs_mask):
    """One (batch-tile, L-tile) grid step.

    Shapes inside the kernel:
      x_ref    : (TB, TL)          TB batch rows on sublanes, positions on lanes
      w1_ref   : (H, 1)            fc1 weight, channels on sublanes
      b1_ref   : (H, 1)
      w2bd_ref : (TB*CP, TB*H)     block-diagonal fc2 weight (bf16, CP = 20 padded to 32)
      b2_ref   : (TB*CP, 1)
      g3_ref   : (TB, TB*CP)       fc3 weight folded with the per-row group-sum selector
      b3_ref   : (1, 1)
      out_ref  : (TB, 1)           per-batch-tile accumulator, revisited across L tiles
    """
    j = pl.program_id(1)
    tb, tl = x_ref.shape

    # Hoisted bias term: add seq * b3 exactly once (first L tile).
    @pl.when(j == 0)
    def _init():
        out_ref[...] = b3_ref[...] * jnp.float32(seq_len) * jnp.ones_like(out_ref)

    w1 = w1_ref[...]                                            # (H, 1)
    b1 = b1_ref[...]                                            # (H, 1)

    # fc1 (Conv1d 1->H, k=1) + ReLU: f32 VPU scale/shift, one batch row at a time,
    # stacked along sublanes so fc2 can run as a single block-diagonal matmul.
    rows = []
    for r in range(tb):                                         # static unroll, tb <= 8
        xr = x_ref[r:r + 1, :]                                  # (1, TL)
        rows.append(jnp.maximum(w1 * xr + b1, 0.0))             # (H, TL)
    h1 = jnp.concatenate(rows, axis=0)                          # (TB*H, TL)

    # fc2 (Conv1d H->20, k=1) + ReLU: one bf16 MXU matmul covering all TB rows,
    # accumulated in f32.
    h2 = jnp.dot(w2bd_ref[...], h1.astype(jnp.bfloat16),
                 preferred_element_type=jnp.float32)            # (TB*CP, TL)
    h2 = jnp.maximum(h2 + b2_ref[...], 0.0)

    if needs_mask:
        # Ragged last tile: padded positions would contribute f(0) != 0, so zero them
        # out AFTER the bias+ReLU (b3 is handled via seq_len above).
        valid = seq_len - j * tl
        lane = jax.lax.broadcasted_iota(jnp.int32, (1, tl), 1)
        h2 = jnp.where(lane < valid, h2, 0.0)

    # fc3 (Conv1d 20->1, k=1) is linear: sum over positions first, then project with w3
    # and group-sum per batch row (both folded into the tiny g3 matmul).
    colsum = jnp.sum(h2, axis=1, keepdims=True)                 # (TB*CP, 1)
    partial = jnp.dot(g3_ref[...], colsum,
                      preferred_element_type=jnp.float32)       # (TB, 1)
    out_ref[...] = out_ref[...] + partial


def _choose_l_tiling(seq_len, target=2048):
    """Bounded lane tile.  target must be a multiple of 128.

    Returns (tile, padded_len): if L <= target the whole row is one tile (block == full
    dim is always legal); otherwise L is padded up to a multiple of `target` and the
    ragged tail is masked inside the kernel.
    """
    if seq_len <= target:
        return seq_len, seq_len
    padded = ((seq_len + target - 1) // target) * target
    return target, padded


@jax.jit
def critic_forward(x, w1, b1, w2, b2, w3, b3):
    """x: (B, L) float32 -> (B, 1) float32, matching the PyTorch Critic.forward."""
    bsz, seq = x.shape
    hidden = w1.shape[1]
    chan = w2.shape[1]                       # 20
    cp = max(32, ((chan + 7) // 8) * 8)      # pad channel dim to a sublane-friendly width

    tb = min(8, bsz)                         # batch rows packed per grid step
    b_pad = ((bsz + tb - 1) // tb) * tb
    tl, l_pad = _choose_l_tiling(seq)
    nb, nl = b_pad // tb, l_pad // tl
    needs_mask = (l_pad != seq)

    x_pad = x
    if (b_pad != bsz) or (l_pad != seq):
        # Padded batch rows are sliced off at the end; padded positions are masked in-kernel.
        x_pad = jnp.pad(x, ((0, b_pad - bsz), (0, l_pad - seq)))

    # Layout plumbing in plain JAX (outside the kernel).
    w1k = jnp.transpose(w1)                                      # (H, 1)
    b1k = jnp.transpose(b1)                                      # (H, 1)
    w2t = jnp.pad(jnp.transpose(w2), ((0, cp - chan), (0, 0)))   # (CP, H), zero-padded rows
    b2p = jnp.pad(jnp.transpose(b2), ((0, cp - chan), (0, 0)))   # (CP, 1)
    w3p = jnp.pad(w3, ((0, cp - chan), (0, 0)))                  # (CP, 1)

    eye = jnp.eye(tb, dtype=jnp.float32)
    # Block-diagonal fc2 weight: W2bd[r*CP+d, r'*H+c] = (r == r') * w2t[d, c]  (bf16).
    w2bd = (eye[:, None, :, None] * w2t[None, :, None, :]).reshape(tb * cp, tb * hidden)
    w2bd = w2bd.astype(jnp.bfloat16)
    b2rep = jnp.tile(b2p, (tb, 1))                               # (TB*CP, 1)
    # fc3 projection fused with per-row group sum: g3[r, r'*CP+d] = (r == r') * w3[d].
    g3 = (eye[:, :, None] * w3p[None, None, :, 0]).reshape(tb, tb * cp)

    # TODO(synk): on v7x with tiny B (nb < 2) the second TensorCore idles; splitting the L
    # axis across cores with a final combine would recover it, irrelevant at these sizes.
    out = pl.pallas_call(
        functools.partial(critic_kernel, seq_len=seq, needs_mask=needs_mask),
        out_shape=jax.ShapeDtypeStruct((b_pad, 1), jnp.float32),
        grid_spec=pltpu.PrefetchScalarGridSpec(
            num_scalar_prefetch=0,
            grid=(nb, nl),
            in_specs=[
                pl.BlockSpec((tb, tl), lambda bi, j: (bi, j)),              # x tile
                pl.BlockSpec((hidden, 1), lambda bi, j: (0, 0)),            # w1 (resident)
                pl.BlockSpec((hidden, 1), lambda bi, j: (0, 0)),            # b1
                pl.BlockSpec((tb * cp, tb * hidden), lambda bi, j: (0, 0)), # block-diag w2 (bf16)
                pl.BlockSpec((tb * cp, 1), lambda bi, j: (0, 0)),           # b2 (replicated)
                pl.BlockSpec((tb, tb * cp), lambda bi, j: (0, 0)),          # w3 + group-sum
                pl.BlockSpec((1, 1), lambda bi, j: (0, 0)),                 # b3 (used at j==0 only)
            ],
            out_specs=pl.BlockSpec((tb, 1), lambda bi, j: (bi, 0)),
        ),
        compiler_params=pltpu.CompilerParams(
            dimension_semantics=("parallel", "arbitrary"),
            vmem_limit_bytes=32 * 1024 * 1024,
        ),
    )(x_pad, w1k, b1k, w2bd, b2rep, g3, b3)
    return out[:bsz]


def init_params(key, hidden_size):
    """Deterministic init matching the module's shapes (xavier_uniform on weights,
    PyTorch-default uniform(-1/sqrt(fan_in), 1/sqrt(fan_in)) on biases)."""
    H, C = hidden_size, 20
    k1, k2, k3, k4, k5, k6 = jax.random.split(key, 6)

    def xavier(k, fan_in, fan_out, shape):
        bound = math.sqrt(6.0 / (fan_in + fan_out))
        return jax.random.uniform(k, shape, jnp.float32, -bound, bound)

    def bias(k, fan_in, shape):
        bound = 1.0 / math.sqrt(fan_in)
        return jax.random.uniform(k, shape, jnp.float32, -bound, bound)

    # Conv1d weights are (out_c, in_c, 1) in torch; stored here as (in_c, out_c) 2D.
    w1 = xavier(k1, 1, H, (1, H))        # fc1.weight (H,1,1) -> (1,H)
    b1 = bias(k2, 1, (1, H))
    w2 = xavier(k3, H, C, (H, C))        # fc2.weight (20,H,1) -> (H,20)
    b2 = bias(k4, H, (1, C))
    w3 = xavier(k5, C, 1, (C, 1))        # fc3.weight (1,20,1) -> (20,1)
    b3 = bias(k6, C, (1, 1))
    return w1, b1, w2, b2, w3, b3


def critic_reference(x, w1, b1, w2, b2, w3, b3):
    """Plain-JAX f32 reference of the PyTorch forward."""
    h1 = jax.nn.relu(x[:, :, None] * w1[None, :, :] + b1[None, :, :])        # (B, L, H)
    h2 = jax.nn.relu(jnp.einsum("blh,hc->blc", h1, w2) + b2[None, :, :])     # (B, L, 20)
    y = jnp.einsum("blc,co->blo", h2, w3) + b3[None, :, :]                   # (B, L, 1)
    return y.sum(axis=1)                                                     # (B, 1)


if __name__ == "__main__":
    B, L, HIDDEN = 2, 16, 32

    key = jax.random.PRNGKey(0)
    kx, kp = jax.random.split(key)
    x = jax.random.normal(kx, (B, L), dtype=jnp.float32)
    params = init_params(kp, HIDDEN)

    out = critic_forward(x, *params)
    out = jax.block_until_ready(out)

    ref = critic_reference(x, *params)
    assert out.shape == (B, 1), out.shape
    # Tolerance relaxed vs. the pure-f32 version: the fc2 matmul uses bf16 operands
    # (f32 accumulation), which introduces ~1e-3..1e-2 relative error (per review).
    assert jnp.allclose(out, ref, atol=5e-2, rtol=5e-2), (out, ref)

    print("KERNEL_OK")
</pallas_src>

<mosaic_0001>
module attributes {stable_mosaic.version = 11 : i64} {
  func.func @critic_kernel(%arg0: i32, %arg1: i32, %arg2: memref<2x16xf32, #tpu.memory_space<vmem>>, %arg3: memref<32x1xf32, #tpu.memory_space<vmem>>, %arg4: memref<32x1xf32, #tpu.memory_space<vmem>>, %arg5: memref<64x64xbf16, #tpu.memory_space<vmem>>, %arg6: memref<64x1xf32, #tpu.memory_space<vmem>>, %arg7: memref<2x64xf32, #tpu.memory_space<vmem>>, %arg8: memref<1x1xf32, #tpu.memory_space<vmem>>, %arg9: memref<2x1xf32, #tpu.memory_space<vmem>>) attributes {dimension_semantics = [#tpu.dimension_semantics<parallel>, #tpu.dimension_semantics<arbitrary>], iteration_bounds = array<i64: 1, 1>, scalar_prefetch = 0 : i64, scratch_operands = 0 : i64, tpu.core_type = #tpu.core_type<tc>, window_params = [{transform_indices = @transform_0, window_bounds = array<i64: 2, 16>}, {pipeline_mode = #tpu.pipeline_mode<synchronous>, transform_indices = @transform_1, window_bounds = array<i64: 32, 1>}, {pipeline_mode = #tpu.pipeline_mode<synchronous>, transform_indices = @transform_2, window_bounds = array<i64: 32, 1>}, {pipeline_mode = #tpu.pipeline_mode<synchronous>, transform_indices = @transform_3, window_bounds = array<i64: 64, 64>}, {pipeline_mode = #tpu.pipeline_mode<synchronous>, transform_indices = @transform_4, window_bounds = array<i64: 64, 1>}, {pipeline_mode = #tpu.pipeline_mode<synchronous>, transform_indices = @transform_5, window_bounds = array<i64: 2, 64>}, {pipeline_mode = #tpu.pipeline_mode<synchronous>, transform_indices = @transform_6, window_bounds = array<i64: 1, 1>}, {transform_indices = @transform_7, window_bounds = array<i64: 2, 1>}]} {
    %c0_i32 = arith.constant 0 : i32
    %0 = arith.cmpi eq, %arg1, %c0_i32 : i32
    %1 = arith.extui %0 : i1 to i32
    %c0_i32_0 = arith.constant 0 : i32
    %2 = arith.cmpi ne, %1, %c0_i32_0 : i32
    scf.if %2 {
      %c0_22 = arith.constant 0 : index
      %c0_23 = arith.constant 0 : index
      %37 = vector.load %arg8[%c0_22, %c0_23] : memref<1x1xf32, #tpu.memory_space<vmem>>, vector<1x1xf32>
      %cst_24 = arith.constant 1.600000e+01 : f32
      %38 = vector.broadcast %cst_24 : f32 to vector<1x1xf32>
      %39 = arith.mulf %37, %38 : vector<1x1xf32>
      %cst_25 = arith.constant 1.000000e+00 : f32
      %40 = vector.broadcast %cst_25 : f32 to vector<2x1xf32>
      %41 = vector.broadcast %39 : vector<1x1xf32> to vector<2x1xf32>
      %42 = arith.mulf %41, %40 : vector<2x1xf32>
      %c0_26 = arith.constant 0 : index
      %c0_27 = arith.constant 0 : index
      %43 = vector.load %arg9[%c0_26, %c0_27] : memref<2x1xf32, #tpu.memory_space<vmem>>, vector<2x1xf32>
      tpu.vector_store %arg9[%c0_26, %c0_27], %42 {strides = array<i32>} : memref<2x1xf32, #tpu.memory_space<vmem>>, vector<2x1xf32>,
    } else {
    }
    %c0 = arith.constant 0 : index
    %c0_1 = arith.constant 0 : index
    %3 = vector.load %arg3[%c0, %c0_1] : memref<32x1xf32, #tpu.memory_space<vmem>>, vector<32x1xf32>
    %c0_2 = arith.constant 0 : index
    %c0_3 = arith.constant 0 : index
    %4 = vector.load %arg4[%c0_2, %c0_3] : memref<32x1xf32, #tpu.memory_space<vmem>>, vector<32x1xf32>
    %c0_4 = arith.constant 0 : index
    %c0_5 = arith.constant 0 : index
    %5 = vector.load %arg2[%c0_4, %c0_5] : memref<2x16xf32, #tpu.memory_space<vmem>>, vector<1x16xf32>
    %6 = vector.broadcast %3 : vector<32x1xf32> to vector<32x16xf32>
    %7 = vector.broadcast %5 : vector<1x16xf32> to vector<32x16xf32>
    %8 = arith.mulf %6, %7 : vector<32x16xf32>
    %9 = vector.broadcast %4 : vector<32x1xf32> to vector<32x16xf32>
    %10 = arith.addf %8, %9 : vector<32x16xf32>
    %cst = arith.constant 0.000000e+00 : f32
    %11 = vector.broadcast %cst : f32 to vector<32x16xf32>
    %12 = arith.maximumf %10, %11 : vector<32x16xf32>
    %c1 = arith.constant 1 : index
    %c0_6 = arith.constant 0 : index
    %13 = vector.load %arg2[%c1, %c0_6] : memref<2x16xf32, #tpu.memory_space<vmem>>, vector<1x16xf32>
    %14 = vector.broadcast %3 : vector<32x1xf32> to vector<32x16xf32>
    %15 = vector.broadcast %13 : vector<1x16xf32> to vector<32x16xf32>
    %16 = arith.mulf %14, %15 : vector<32x16xf32>
    %17 = vector.broadcast %4 : vector<32x1xf32> to vector<32x16xf32>
    %18 = arith.addf %16, %17 : vector<32x16xf32>
    %cst_7 = arith.constant 0.000000e+00 : f32
    %19 = vector.broadcast %cst_7 : f32 to vector<32x16xf32>
    %20 = arith.maximumf %18, %19 : vector<32x16xf32>
    %21 = tpu.concatenate %12, %20 in 0 : vector<32x16xf32>, vector<32x16xf32> -> vector<64x16xf32>
    %c0_8 = arith.constant 0 : index
    %c0_9 = arith.constant 0 : index
    %22 = vector.load %arg5[%c0_8, %c0_9] : memref<64x64xbf16, #tpu.memory_space<vmem>>, vector<64x64xbf16>
    %23 = arith.truncf %21 : vector<64x16xf32> to vector<64x16xbf16>
    %cst_10 = arith.constant dense<0.000000e+00> : vector<64x16xf32>
    %24 = tpu.matmul %22, %23, %cst_10 {dimension_numbers = #tpu.dot_dimension_numbers<[1], [0], [0], [1], [0, 0, 1, 1], [], []>} : vector<64x64xbf16>, vector<64x16xbf16>, vector<64x16xf32> -> vector<64x16xf32>
    %c0_11 = arith.constant 0 : index
    %c0_12 = arith.constant 0 : index
    %25 = vector.load %arg6[%c0_11, %c0_12] : memref<64x1xf32, #tpu.memory_space<vmem>>, vector<64x1xf32>
    %26 = vector.broadcast %25 : vector<64x1xf32> to vector<64x16xf32>
    %27 = arith.addf %24, %26 : vector<64x16xf32>
    %cst_13 = arith.constant 0.000000e+00 : f32
    %28 = vector.broadcast %cst_13 : f32 to vector<64x16xf32>
    %29 = arith.maximumf %27, %28 : vector<64x16xf32>
    %cst_14 = arith.constant dense<0.000000e+00> : vector<64xf32>
    %30 = vector.multi_reduction <add>, %29, %cst_14 [1] : vector<64x16xf32> to vector<64xf32>
    %31 = vector.shape_cast %30 : vector<64xf32> to vector<64x1xf32>
    %c0_15 = arith.constant 0 : index
    %c0_16 = arith.constant 0 : index
    %32 = vector.load %arg7[%c0_15, %c0_16] : memref<2x64xf32, #tpu.memory_space<vmem>>, vector<2x64xf32>
    %cst_17 = arith.constant dense<0.000000e+00> : vector<2x1xf32>
    %33 = tpu.matmul %32, %31, %cst_17 {dimension_numbers = #tpu.dot_dimension_numbers<[1], [0], [0], [1], [0, 0, 1, 1], [], []>} : vector<2x64xf32>, vector<64x1xf32>, vector<2x1xf32> -> vector<2x1xf32>
    %c0_18 = arith.constant 0 : index
    %c0_19 = arith.constant 0 : index
    %34 = vector.load %arg9[%c0_18, %c0_19] : memref<2x1xf32, #tpu.memory_space<vmem>>, vector<2x1xf32>
    %35 = arith.addf %34, %33 : vector<2x1xf32>
    %c0_20 = arith.constant 0 : index
    %c0_21 = arith.constant 0 : index
    %36 = vector.load %arg9[%c0_20, %c0_21] : memref<2x1xf32, #tpu.memory_space<vmem>>, vector<2x1xf32>
    tpu.vector_store %arg9[%c0_20, %c0_21], %35 {strides = array<i32>} : memref<2x1xf32, #tpu.memory_space<vmem>>, vector<2x1xf32>,
    return
  }
  func.func @transform_0(%arg0: i32, %arg1: i32) -> (i32, i32) {
    %c0_i32 = arith.constant 0 : i32
    return %arg0, %arg1 : i32, i32
  }
  func.func @transform_1(%arg0: i32, %arg1: i32) -> (i32, i32) {
    %c0_i32 = arith.constant 0 : i32
    %c0_i32_0 = arith.constant 0 : i32
    %c0_i32_1 = arith.constant 0 : i32
    return %c0_i32, %c0_i32_0 : i32, i32
  }
  func.func @transform_2(%arg0: i32, %arg1: i32) -> (i32, i32) {
    %c0_i32 = arith.constant 0 : i32
    %c0_i32_0 = arith.constant 0 : i32
    %c0_i32_1 = arith.constant 0 : i32
    return %c0_i32, %c0_i32_0 : i32, i32
  }
  func.func @transform_3(%arg0: i32, %arg1: i32) -> (i32, i32) {
    %c0_i32 = arith.constant 0 : i32
    %c0_i32_0 = arith.constant 0 : i32
    %c0_i32_1 = arith.constant 0 : i32
    return %c0_i32, %c0_i32_0 : i32, i32
  }
  func.func @transform_4(%arg0: i32, %arg1: i32) -> (i32, i32) {
    %c0_i32 = arith.constant 0 : i32
    %c0_i32_0 = arith.constant 0 : i32
    %c0_i32_1 = arith.constant 0 : i32
    return %c0_i32, %c0_i32_0 : i32, i32
  }
  func.func @transform_5(%arg0: i32, %arg1: i32) -> (i32, i32) {
    %c0_i32 = arith.constant 0 : i32
    %c0_i32_0 = arith.constant 0 : i32
    %c0_i32_1 = arith.constant 0 : i32
    return %c0_i32, %c0_i32_0 : i32, i32
  }
  func.func @transform_6(%arg0: i32, %arg1: i32) -> (i32, i32) {
    %c0_i32 = arith.constant 0 : i32
    %c0_i32_0 = arith.constant 0 : i32
    %c0_i32_1 = arith.constant 0 : i32
    return %c0_i32, %c0_i32_0 : i32, i32
  }
  func.func @transform_7(%arg0: i32, %arg1: i32) -> (i32, i32) {
    %c0_i32 = arith.constant 0 : i32
    %c0_i32_0 = arith.constant 0 : i32
    return %arg0, %c0_i32 : i32, i32
  }
}

</mosaic_0001>

<llo_original>
// kernel: critic_forward.1
$region0: #{critic_forward.1}
  #allocation0 [shape = 'u32[]', space=smem, size = 0x4, offset = 0x4, fixed_abs, tag = 'smem constant byte address 0x4 - core index']
  #allocation1 [shape = 'u32[144,128]{1,0:T(1,128)}', space=vmem, size = 0x12000, scoped, tag = 'internal scratch']
  #allocation2 [shape = 'f32[1,1]{1,0:T(1,128)S(1)}', space=vmem, size = 0x200, scoped, tag = 'scoped memory for critic_forward.1']
  %s0 = inlined_call_operand.vmem [shape: f32[2,16], index: 0, kind: input, shape index: {}]
  %s1 = inlined_call_operand.vmem [shape: f32[32,1], index: 1, kind: input, shape index: {}]
  %s2 = inlined_call_operand.vmem [shape: f32[32,1], index: 2, kind: input, shape index: {}]
  %s3 = inlined_call_operand.vmem [shape: bf16[64,64], index: 3, kind: input, shape index: {}]
  %s4 = inlined_call_operand.vmem [shape: f32[64,1], index: 4, kind: input, shape index: {}]
  %s5 = inlined_call_operand.vmem [shape: f32[2,64], index: 5, kind: input, shape index: {}]
  %s6 = inlined_call_operand.<no memory space> [shape: f32[1,1], index: 6, kind: input, shape index: {}]
  %s7 = inlined_call_operand.vmem [shape: f32[2,1], index: 7, kind: output, shape index: {}]
  %s8 = sld [smem:[#allocation0]]
  $region42: #{critic_forward.1} parent=0
    _
  %s10 = ssub.s32 1, %s8
  %s11 = scalar_select 0, %s10, %s8
  %v12 = vstv %s6
  %13 = vst [vmem:[#allocation2] sm:$0x1] %v12
  // Predicated region
  $region2: #{critic_forward.1} parent=0 // pred_check
    _
  $region3: #{critic_forward.1} parent=0 // pred_check_branch
    %15 = sbr.rel (0) target = $region5
  $region4: #{critic_forward.1} parent=0 // pred_region
    _
  $region5: #{critic_forward.1} parent=0 // pred_fallthru
    _
  // Predicated region
  $region6: #{critic_forward.1} parent=0 // pred_check
    _
  $region7: #{critic_forward.1} parent=0 // pred_check_branch
    %17 = sbr.rel (0) target = $region9
  $region8: #{critic_forward.1} parent=0 // pred_region
    _
  $region9: #{critic_forward.1} parent=0 // pred_fallthru
    _
  // Predicated region
  $region10: #{critic_forward.1} parent=0 // pred_check
    _
  $region11: #{critic_forward.1} parent=0 // pred_check_branch
    %19 = sbr.rel (0) target = $region13
  $region12: #{critic_forward.1} parent=0 // pred_region
    _
  $region13: #{critic_forward.1} parent=0 // pred_fallthru
    _
  // Predicated region
  $region14: #{critic_forward.1} parent=0 // pred_check
    _
  $region15: #{critic_forward.1} parent=0 // pred_check_branch
    %21 = sbr.rel (0) target = $region17
  $region16: #{critic_forward.1} parent=0 // pred_region
    _
  $region17: #{critic_forward.1} parent=0 // pred_fallthru
    _
  // Predicated region
  $region18: #{critic_forward.1} parent=0 // pred_check
    _
  $region19: #{critic_forward.1} parent=0 // pred_check_branch
    %23 = sbr.rel (0) target = $region21
  $region20: #{critic_forward.1} parent=0 // pred_region
    _
  $region21: #{critic_forward.1} parent=0 // pred_fallthru
    _
  // Predicated region
  $region22: #{critic_forward.1} parent=0 // pred_check
    _
  $region23: #{critic_forward.1} parent=0 // pred_check_branch
    %25 = sbr.rel (0) target = $region25
  $region24: #{critic_forward.1} parent=0 // pred_region
    _
  $region25: #{critic_forward.1} parent=0 // pred_fallthru
    _
  // Predicated region
  $region26: #{critic_forward.1} parent=0 // pred_check
    _
  $region27: #{critic_forward.1} parent=0 // pred_check_branch
    %27 = sbr.rel (0) target = $region29
  $region28: #{critic_forward.1} parent=0 // pred_region
    _
  $region29: #{critic_forward.1} parent=0 // pred_fallthru
    _
  %p29 = scmp.eq.s32.totalorder 0, 0
  // Predicated region
  $region30: #{critic_forward.1} parent=0 // pred_check
    %p30 = pneg %p29
  $region31: #{critic_forward.1} parent=0 // pred_check_branch
    %32 = sbr.rel (%p30) target = $region33
  $region32: #{critic_forward.1} parent=0 // pred_region
    %v33 = vld [vmem:[#allocation2] sm:$0x1]
    %v34 = vmul.f32 %v33, 16.0
    %v36 = vlaneseq
    %v37 = vshrl.u32 %v36, 7
    %v38 = vsub.s32 0, %v37
    %v39 = vrot.slane %v34, %v38
    %vm41 = vcmask 1024
    %42 = vst.msk [vmem:[%s7] sm:$0x3] %vm41, %v39
  $region33: #{critic_forward.1} parent=0 // pred_fallthru
    _
  %v43 = vld [vmem:[%s1] sm:$0xff]
  %v44 = vld [vmem:[%s1 + $0x8] sm:$0xff]
  %v45 = vld [vmem:[%s1 + $0x10] sm:$0xff]
  %v46 = vld [vmem:[%s1 + $0x18] sm:$0xff]
  %v47 = vld [vmem:[%s2] sm:$0xff]
  %v48 = vld [vmem:[%s2 + $0x8] sm:$0xff]
  %v49 = vld [vmem:[%s2 + $0x10] sm:$0xff]
  %v50 = vld [vmem:[%s2 + $0x18] sm:$0xff]
  %v51 = vld [vmem:[%s0] sm:$0x1]
  %53 = vset.pattern.permute.xlu0 0
  %54 = vperm.xlu0 %53, %v43
  %v55 = vpop.permute.xlu0 %54
  %58 = vset.pattern.permute.xlu0 0
  %59 = vperm.xlu0 %58, %v44
  %v60 = vpop.permute.xlu0 %59
  %63 = vset.pattern.permute.xlu0 0
  %64 = vperm.xlu0 %63, %v45
  %v65 = vpop.permute.xlu0 %64
  %68 = vset.pattern.permute.xlu0 0
  %69 = vperm.xlu0 %68, %v46
  %v70 = vpop.permute.xlu0 %69
  %v72 = vlaneseq
  %v73 = vshrl.u32 %v72, 7
  %v74 = vsub.s32 0, %v73
  %v75 = vrot.slane %v51, %v74
  %v76 = vmul.f32 %v55, %v75
  %v77 = vmul.f32 %v60, %v75
  %v78 = vmul.f32 %v65, %v75
  %v79 = vmul.f32 %v70, %v75
  %81 = vset.pattern.permute.xlu0 0
  %82 = vperm.xlu0 %81, %v47
  %v83 = vpop.permute.xlu0 %82
  %86 = vset.pattern.permute.xlu0 0
  %87 = vperm.xlu0 %86, %v48
  %v88 = vpop.permute.xlu0 %87
  %91 = vset.pattern.permute.xlu0 0
  %92 = vperm.xlu0 %91, %v49
  %v93 = vpop.permute.xlu0 %92
  %96 = vset.pattern.permute.xlu0 0
  %97 = vperm.xlu0 %96, %v50
  %v98 = vpop.permute.xlu0 %97
  %v100 = vadd.f32 %v76, %v83
  %v101 = vadd.f32 %v77, %v88
  %v102 = vadd.f32 %v78, %v93
  %v103 = vadd.f32 %v79, %v98
  %v104 = vmax.f32 %v100, 0.0
  %v105 = vmax.f32 %v101, 0.0
  %v106 = vmax.f32 %v102, 0.0
  %v107 = vmax.f32 %v103, 0.0
  %v108 = vld [vmem:[%s0 + $0x1] sm:$0x1]
  %v109 = vlaneseq
  %v110 = vshrl.u32 %v109, 7
  %v111 = vsub.s32 0, %v110
  %v112 = vrot.slane %v108, %v111
  %v113 = vmul.f32 %v55, %v112
  %v114 = vmul.f32 %v60, %v112
  %v115 = vmul.f32 %v65, %v112
  %v116 = vmul.f32 %v70, %v112
  %v117 = vadd.f32 %v113, %v83
  %v118 = vadd.f32 %v114, %v88
  %v119 = vadd.f32 %v115, %v93
  %v120 = vadd.f32 %v116, %v98
  %v121 = vmax.f32 %v117, 0.0
  %v122 = vmax.f32 %v118, 0.0
  %v123 = vmax.f32 %v119, 0.0
  %v124 = vmax.f32 %v120, 0.0
  %v125 = vld [vmem:[%s3] sm:$0xf]
  %v126 = vld [vmem:[%s3 + $0x4] sm:$0xf]
  %v127 = vld [vmem:[%s3 + $0x8] sm:$0xf]
  %v128 = vld [vmem:[%s3 + $0xc] sm:$0xf]
  %v129 = vld [vmem:[%s3 + $0x10] sm:$0xf]
  %v130 = vld [vmem:[%s3 + $0x14] sm:$0xf]
  %v131 = vld [vmem:[%s3 + $0x18] sm:$0xf]
  %v132 = vld [vmem:[%s3 + $0x1c] sm:$0xf]
  %v133 = vpack.c.bf16 %v105, %v104
  %v134 = vpack.c.bf16 %v107, %v106
  %v135 = vpack.c.bf16 %v122, %v121
  %v136 = vpack.c.bf16 %v124, %v123
  %v137 = vld [vmem:[%s4] sm:$0xff]
  %v138 = vld [vmem:[%s4 + $0x8] sm:$0xff]
  %v139 = vld [vmem:[%s4 + $0x10] sm:$0xff]
  %v140 = vld [vmem:[%s4 + $0x18] sm:$0xff]
  %v141 = vld [vmem:[%s4 + $0x20] sm:$0xff]
  %v142 = vld [vmem:[%s4 + $0x28] sm:$0xff]
  %v143 = vld [vmem:[%s4 + $0x30] sm:$0xff]
  %v144 = vld [vmem:[%s4 + $0x38] sm:$0xff]
  %146 = vset.pattern.permute.xlu0 0
  %147 = vperm.xlu0 %146, %v137
  %v148 = vpop.permute.xlu0 %147
  %151 = vset.pattern.permute.xlu0 0
  %152 = vperm.xlu0 %151, %v138
  %v153 = vpop.permute.xlu0 %152
  %156 = vset.pattern.permute.xlu0 0
  %157 = vperm.xlu0 %156, %v139
  %v158 = vpop.permute.xlu0 %157
  %161 = vset.pattern.permute.xlu0 0
  %162 = vperm.xlu0 %161, %v140
  %v163 = vpop.permute.xlu0 %162
  %166 = vset.pattern.permute.xlu0 0
  %167 = vperm.xlu0 %166, %v141
  %v168 = vpop.permute.xlu0 %167
  %171 = vset.pattern.permute.xlu0 0
  %172 = vperm.xlu0 %171, %v142
  %v173 = vpop.permute.xlu0 %172
  %176 = vset.pattern.permute.xlu0 0
  %177 = vperm.xlu0 %176, %v143
  %v178 = vpop.permute.xlu0 %177
  %181 = vset.pattern.permute.xlu0 0
  %182 = vperm.xlu0 %181, %v144
  %v183 = vpop.permute.xlu0 %182
  %v193 = vunpack.c.l.b16 %v125
  %v194 = vunpack.c.l.b16 %v126
  %v195 = vunpack.c.l.b16 %v127
  %v196 = vunpack.c.l.b16 %v128
  %v197 = vunpack.c.l.b16 %v129
  %v198 = vunpack.c.l.b16 %v130
  %v199 = vunpack.c.l.b16 %v131
  %v200 = vunpack.c.l.b16 %v132
  %v201 = vpack.c.b16 %v194, %v193
  %v202 = vpack.c.b16 %v196, %v195
  %v203 = vpack.c.b16 %v198, %v197
  %v204 = vpack.c.b16 %v200, %v199
  %vm205 = vcmask 523264
  %v207 = vsel %vm205, %v201, 0
  %v210 = vsel %vm205, %v202, 0
  %v213 = vsel %vm205, %v203, 0
  %v216 = vsel %vm205, %v204, 0
  %218 = vmatprep.subr.bf16.mxu0 0
  %219 = vmatpush1.bf16.msra.mxu0 %v133
  %220 = vmatprep.subr.bf16.mxu0 0
  %221 = vmatpush1.bf16.msra.mxu0 %v134
  %222 = vmatprep.subr.bf16.mxu0 0
  %223 = vmatpush1.bf16.msra.mxu0 %v135
  %224 = vmatprep.subr.bf16.mxu0 0
  %225 = vmatpush1.bf16.msra.mxu0 %v136
  %226 = vmatprep.subr.bf16.mxu0 0
  %227 = vmatpush1.bf16.msra.mxu0 0
  %228 = vmatprep.subr.bf16.mxu0 0
  %229 = vmatpush1.bf16.msra.mxu0 0
  %230 = vmatprep.subr.bf16.mxu0 0
  %231 = vmatpush1.bf16.msra.mxu0 0
  %232 = vmatprep.subr.bf16.mxu0 0
  %233 = vmatpush1.bf16.msra.mxu0 0
  %234 = vmatprep.subr.bf16.mxu0 0
  %235 = vmatpush1.bf16.msra.mxu0 0
  %236 = vmatprep.subr.bf16.mxu0 0
  %237 = vmatpush1.bf16.msra.mxu0 0
  %238 = vmatprep.subr.bf16.mxu0 0
  %239 = vmatpush1.bf16.msra.mxu0 0
  %240 = vmatprep.subr.bf16.mxu0 0
  %241 = vmatpush1.bf16.msra.mxu0 0
  %242 = vmatprep.subr.bf16.mxu0 0
  %243 = vmatpush1.bf16.msra.mxu0 0
  %244 = vmatprep.subr.bf16.mxu0 0
  %245 = vmatpush1.bf16.msra.mxu0 0
  %246 = vmatprep.subr.bf16.mxu0 0
  %247 = vmatpush1.bf16.msra.mxu0 0
  %248 = vmatprep.subr.bf16.mxu0 0
  %249 = vmatpush1.bf16.msra.mxu0 0
  %250 = vmatprep.mubr.bf16.mxu0 0
  %251 = vmatmul.mubr.bf16.gmra.mrb[0].mxu0 %v207
  %v252 = vpop.f32.mrb[0].mxu0
  %v253 = vadd.f32 %v148, %v252
  %v254 = vpop.f32.mrb[0].mxu0
  %v255 = vpop.f32.mrb[0].mxu0
  %v256 = vadd.f32 %v153, %v255
  %v257 = vpop.f32.mrb[0].mxu0
  %258 = vmatprep.mubr.bf16.mxu0 0
  %259 = vmatmul.mubr.bf16.gmra.mrb[0].mxu0 %v210
  %v260 = vpop.f32.mrb[0].mxu0
  %v261 = vadd.f32 %v158, %v260
  %v262 = vpop.f32.mrb[0].mxu0
  %v263 = vpop.f32.mrb[0].mxu0
  %v264 = vadd.f32 %v163, %v263
  %v265 = vpop.f32.mrb[0].mxu0
  %266 = vmatprep.mubr.bf16.mxu0 0
  %267 = vmatmul.mubr.bf16.gmra.mrb[0].mxu0 %v213
  %v268 = vpop.f32.mrb[0].mxu0
  %v269 = vadd.f32 %v168, %v268
  %v270 = vpop.f32.mrb[0].mxu0
  %v271 = vpop.f32.mrb[0].mxu0
  %v272 = vadd.f32 %v173, %v271
  %v273 = vpop.f32.mrb[0].mxu0
  %274 = vmatprep.mubr.bf16.mxu0 0
  %275 = vmatmul.mubr.bf16.gmra.mrb[0].mxu0 %v216
  %v276 = vpop.f32.mrb[0].mxu0
  %v277 = vadd.f32 %v178, %v276
  %v278 = vpop.f32.mrb[0].mxu0
  %v279 = vpop.f32.mrb[0].mxu0
  %v280 = vadd.f32 %v183, %v279
  %v281 = vpop.f32.mrb[0].mxu0
  %282 = vdwg.mxu0
  %v283 = vmax.f32 %v253, 0.0
  %v284 = vmax.f32 %v256, 0.0
  %v285 = vmax.f32 %v261, 0.0
  %v286 = vmax.f32 %v264, 0.0
  %v287 = vmax.f32 %v269, 0.0
  %v288 = vmax.f32 %v272, 0.0
  %v289 = vmax.f32 %v277, 0.0
  %v290 = vmax.f32 %v280, 0.0
  %vm291 = vcmask 130048
  %v292 = vsel %vm291, %v283, 0.0
  %293 = vadd.xlane.f32.xlu0 %v292
  %v294 = vpop.xlane.xlu0 %293
  %v295 = vsel %vm291, %v284, 0.0
  %296 = vadd.xlane.f32.xlu0 %v295
  %v297 = vpop.xlane.xlu0 %296
  %v298 = vsel %vm291, %v285, 0.0
  %299 = vadd.xlane.f32.xlu0 %v298
  %v300 = vpop.xlane.xlu0 %299
  %v301 = vsel %vm291, %v286, 0.0
  %302 = vadd.xlane.f32.xlu0 %v301
  %v303 = vpop.xlane.xlu0 %302
  %v304 = vsel %vm291, %v287, 0.0
  %305 = vadd.xlane.f32.xlu0 %v304
  %v306 = vpop.xlane.xlu0 %305
  %v307 = vsel %vm291, %v288, 0.0
  %308 = vadd.xlane.f32.xlu0 %v307
  %v309 = vpop.xlane.xlu0 %308
  %v310 = vsel %vm291, %v289, 0.0
  %311 = vadd.xlane.f32.xlu0 %v310
  %v312 = vpop.xlane.xlu0 %311
  %v313 = vsel %vm291, %v290, 0.0
  %314 = vadd.xlane.f32.xlu0 %v313
  %v315 = vpop.xlane.xlu0 %314
  %v316 = vld [vmem:[%s5] sm:$0x3]
  %v318 = vsel %vm205, %v316, 0
  %320 = vmatprep.subr.mxu0 0.0
  %321 = vmatpush1.msra.mxu0 %v294
  %322 = vmatprep.subr.mxu0 0.0
  %323 = vmatpush1.msra.mxu0 %v297
  %324 = vmatprep.subr.mxu0 0.0
  %325 = vmatpush1.msra.mxu0 %v300
  %326 = vmatprep.subr.mxu0 0.0
  %327 = vmatpush1.msra.mxu0 %v303
  %328 = vmatprep.subr.mxu0 0.0
  %329 = vmatpush1.msra.mxu0 %v306
  %330 = vmatprep.subr.mxu0 0.0
  %331 = vmatpush1.msra.mxu0 %v309
  %332 = vmatprep.subr.mxu0 0.0
  %333 = vmatpush1.msra.mxu0 %v312
  %334 = vmatprep.subr.mxu0 0.0
  %335 = vmatpush1.msra.mxu0 %v315
  %336 = vmatprep.subr.mxu0 0.0
  %337 = vmatpush1.msra.mxu0 0.0
  %338 = vmatprep.subr.mxu0 0.0
  %339 = vmatpush1.msra.mxu0 0.0
  %340 = vmatprep.subr.mxu0 0.0
  %341 = vmatpush1.msra.mxu0 0.0
  %342 = vmatprep.subr.mxu0 0.0
  %343 = vmatpush1.msra.mxu0 0.0
  %344 = vmatprep.subr.mxu0 0.0
  %345 = vmatpush1.msra.mxu0 0.0
  %346 = vmatprep.subr.mxu0 0.0
  %347 = vmatpush1.msra.mxu0 0.0
  %348 = vmatprep.subr.mxu0 0.0
  %349 = vmatpush1.msra.mxu0 0.0
  %350 = vmatprep.subr.mxu0 0.0
  %351 = vmatpush1.msra.mxu0 0.0
  %352 = vmatprep.subr.mxu0 0.0
  %353 = vmatpush1.msra.mxu0 0.0
  %354 = vmatprep.subr.mxu0 0.0
  %355 = vmatpush1.msra.mxu0 0.0
  %356 = vmatprep.subr.mxu0 0.0
  %357 = vmatpush1.msra.mxu0 0.0
  %358 = vmatprep.subr.mxu0 0.0
  %359 = vmatpush1.msra.mxu0 0.0
  %360 = vmatprep.subr.mxu0 0.0
  %361 = vmatpush1.msra.mxu0 0.0
  %362 = vmatprep.subr.mxu0 0.0
  %363 = vmatpush1.msra.mxu0 0.0
  %364 = vmatprep.subr.mxu0 0.0
  %365 = vmatpush1.msra.mxu0 0.0
  %366 = vmatprep.subr.mxu0 0.0
  %367 = vmatpush1.msra.mxu0 0.0
  %368 = vmatprep.subr.mxu0 0.0
  %369 = vmatpush1.msra.mxu0 0.0
  %370 = vmatprep.subr.mxu0 0.0
  %371 = vmatpush1.msra.mxu0 0.0
  %372 = vmatprep.subr.mxu0 0.0
  %373 = vmatpush1.msra.mxu0 0.0
  %374 = vmatprep.subr.mxu0 0.0
  %375 = vmatpush1.msra.mxu0 0.0
  %376 = vmatprep.subr.mxu0 0.0
  %377 = vmatpush1.msra.mxu0 0.0
  %378 = vmatprep.subr.mxu0 0.0
  %379 = vmatpush1.msra.mxu0 0.0
  %380 = vmatprep.subr.mxu0 0.0
  %381 = vmatpush1.msra.mxu0 0.0
  %382 = vmatprep.subr.mxu0 0.0
  %383 = vmatpush1.msra.mxu0 0.0
  %384 = vmatprep.mubr.f32.mxu0 0.0
  %385 = vmatmul.mubr.f32.gmra.mrb[0].mxu0 %v318
  %v386 = vpop.f32.mrb[0].mxu0
  %v387 = vadd.f32 0.0, %v386
  %v388 = vpop.f32.mrb[0].mxu0
  %389 = vdwg.mxu0
  %v390 = vld [vmem:[%s7] sm:$0x3]
  %v391 = vadd.f32 %v390, %v387
  %vm392 = vcmask 1024
  %393 = vst.msk [vmem:[%s7] sm:$0x3] %vm392, %v391
  // Predicated region
  $region34: #{critic_forward.1} parent=0 // pred_check
    _
  $region35: #{critic_forward.1} parent=0 // pred_check_branch
    %395 = sbr.rel (0) target = $region37
  $region36: #{critic_forward.1} parent=0 // pred_region
    _
  $region37: #{critic_forward.1} parent=0 // pred_fallthru
    _
  // Predicated region
  $region38: #{critic_forward.1} parent=0 // pred_check
    _
  $region39: #{critic_forward.1} parent=0 // pred_check_branch
    %397 = sbr.rel (0) target = $region41
  $region40: #{critic_forward.1} parent=0 // pred_region
    _
  $region41: #{critic_forward.1} parent=0 // pred_fallthru
    _

</llo_original>
